<compile_context>
chip_gen: v7x
topology: tpu7x:2x2x1
jax: 0.10.0
libtpu: 0.0.40
codegen_flags: <defaults>
</compile_context>

<pallas_src>
import math

import jax
import jax.numpy as jnp
from jax.experimental import pallas as pl
from jax.experimental.pallas import tpu as pltpu

EPS = 1e-6  # matches nn.LayerNorm(eps=1e-06)


def _nbytes(shape, dtype):
    return math.prod(shape) * jnp.dtype(dtype).itemsize


# -----------------------------------------------------------------------------
# Kernel 1: gated projection ("gated" token projection) fused with LayerNorm
#   y   = x @ W1 + b1
#   y   = y * sigmoid(y @ W2 + b2)
#   out = LayerNorm(y) * gamma + beta          (stored bf16)
# -----------------------------------------------------------------------------
def _gated_proj_ln_kernel(x_ref, w1_ref, b1_ref, w2_ref, b2_ref,
                          g_ref, be_ref, o_ref):
    x = x_ref[...]                                                       # bf16 (R, Din)
    y = jnp.dot(x, w1_ref[...], preferred_element_type=jnp.float32) + b1_ref[...]
    gate = jnp.dot(y.astype(jnp.bfloat16), w2_ref[...],
                   preferred_element_type=jnp.float32) + b2_ref[...]
    y = y * jax.nn.sigmoid(gate)                                         # f32
    mean = jnp.mean(y, axis=-1, keepdims=True)
    var = jnp.mean(jnp.square(y - mean), axis=-1, keepdims=True)
    yn = (y - mean) * jax.lax.rsqrt(var + EPS)
    o_ref[...] = (yn * g_ref[...] + be_ref[...]).astype(o_ref.dtype)


def _proj_vmem_limit(tile_rows, din, d):
    blocks = (_nbytes((tile_rows, din), jnp.bfloat16)     # input tile
              + _nbytes((din, d), jnp.bfloat16)           # w1
              + _nbytes((d, d), jnp.bfloat16)             # w2
              + 4 * _nbytes((1, d), jnp.float32)          # biases + LN affine
              + _nbytes((tile_rows, d), jnp.bfloat16))    # output tile
    interm = 6 * _nbytes((tile_rows, d), jnp.float32)     # f32 intermediates
    return int(2 * blocks + interm + (8 << 20))           # dbl-buffer + headroom


def gated_proj_ln(x2d, p, tile_rows=512):
    n, din = x2d.shape
    d = p["w1"].shape[1]
    x2d = x2d.astype(jnp.bfloat16)                 # halve the input DMA bytes
    tile_rows = min(tile_rows, max(8, pl.cdiv(n, 8) * 8))
    n_pad = pl.cdiv(n, tile_rows) * tile_rows
    if n_pad != n:
        x2d = jnp.pad(x2d, ((0, n_pad - n), (0, 0)))

    def full(shape):
        return pl.BlockSpec(shape, lambda i: (0, 0))

    out = pl.pallas_call(
        _gated_proj_ln_kernel,
        out_shape=jax.ShapeDtypeStruct((n_pad, d), jnp.bfloat16),
        grid=(n_pad // tile_rows,),
        in_specs=[
            pl.BlockSpec((tile_rows, din), lambda i: (i, 0)),
            full((din, d)), full((1, d)),
            full((d, d)), full((1, d)),
            full((1, d)), full((1, d)),
        ],
        out_specs=pl.BlockSpec((tile_rows, d), lambda i: (i, 0)),
        compiler_params=pltpu.CompilerParams(
            dimension_semantics=("parallel",),
            vmem_limit_bytes=_proj_vmem_limit(tile_rows, din, d)),
    )(x2d, p["w1"], p["b1"], p["w2"], p["b2"], p["gamma"], p["beta"])
    return out[:n]


# -----------------------------------------------------------------------------
# Kernel 2: all six FusionTransformer cross-attention calls + mean pooling,
#           one pallas_call with grid = (6,).  Batch folded into the matmul
#           row axis, fused QKV weight, weights VMEM-resident across steps,
#           modality blocks picked via scalar-prefetch indices.
# -----------------------------------------------------------------------------
def _fusion6_kernel(qm_ref, km_ref, qlen_ref, klen_ref,     # scalar prefetch (SMEM)
                    q_tok_ref, k_tok_ref,                   # (B, Smax, D) bf16
                    lnq_g, lnq_b, lnk_g, lnk_b,
                    wqkv, bqkv, wo, bo,
                    ln2_g, ln2_b, w1, b1, w2, b2,
                    o_ref):                                 # (B, D) f32 pooled
    pair = pl.program_id(0)
    B, Sq, D = q_tok_ref.shape
    Sk = k_tok_ref.shape[1]
    BSq = B * Sq
    BSk = B * Sk
    q_len = qlen_ref[pair]
    k_len = klen_ref[pair]

    def ln(x, g, b):
        m = jnp.mean(x, axis=-1, keepdims=True)
        v = jnp.mean(jnp.square(x - m), axis=-1, keepdims=True)
        return (x - m) * jax.lax.rsqrt(v + EPS) * g[...] + b[...]

    # fold batch into the matmul row axis
    q_in = q_tok_ref[...].reshape(BSq, D).astype(jnp.float32)           # (BSq, D)
    k_in = k_tok_ref[...].reshape(BSk, D).astype(jnp.float32)           # (BSk, D)

    qn = ln(q_in, lnq_g, lnq_b).astype(jnp.bfloat16)
    kn = ln(k_in, lnk_g, lnk_b).astype(jnp.bfloat16)

    # single fused QKV projection (1/sqrt(D) pre-folded into the Q slice)
    rows = jnp.concatenate([qn, kn], axis=0)                            # (BSq+BSk, D)
    qkv = jnp.dot(rows, wqkv[...], preferred_element_type=jnp.float32) + bqkv[...]
    Q = qkv[:BSq, :D]
    K = qkv[BSq:, D:2 * D]
    V = qkv[BSq:, 2 * D:]

    # per-(pair, batch) attention blocks for the softmax only
    Qb = Q.reshape(B, Sq, D).astype(jnp.bfloat16)
    Kb = K.reshape(B, Sk, D).astype(jnp.bfloat16)
    scores = jnp.einsum('bqd,bkd->bqk', Qb, Kb,
                        preferred_element_type=jnp.float32)             # (B,Sq,Sk)
    kmask = jax.lax.broadcasted_iota(jnp.int32, (B, Sq, Sk), 2) < k_len
    scores = jnp.where(kmask, scores, -1e30)
    scores = scores - jnp.max(scores, axis=-1, keepdims=True)
    e = jnp.exp(scores)
    probs = e * pl.reciprocal(jnp.sum(e, axis=-1, keepdims=True), approx=True)
    ctx = jnp.einsum('bqk,bkd->bqd', probs.astype(jnp.bfloat16),
                     V.reshape(B, Sk, D).astype(jnp.bfloat16),
                     preferred_element_type=jnp.float32).reshape(BSq, D)

    attn_out = jnp.dot(ctx.astype(jnp.bfloat16), wo[...],
                       preferred_element_type=jnp.float32) + bo[...]
    x = q_in + attn_out                                                 # residual

    xn = ln(x, ln2_g, ln2_b).astype(jnp.bfloat16)
    h = jnp.dot(xn, w1[...], preferred_element_type=jnp.float32) + b1[...]
    h = jax.nn.gelu(h).astype(jnp.bfloat16)
    mlp = jnp.dot(h, w2[...], preferred_element_type=jnp.float32) + b2[...]
    x = x + mlp                                                         # (BSq, D)

    # fused `.mean(dim=1)` over the *valid* query tokens only
    xb = x.reshape(B, Sq, D)
    qmask = (jax.lax.broadcasted_iota(jnp.int32, (B, Sq, D), 1) < q_len
             ).astype(jnp.float32)
    denom = jnp.maximum(q_len, 1).astype(jnp.float32)
    o_ref[...] = jnp.sum(xb * qmask, axis=1) / denom                    # (B, D)


def _fusion_vmem_limit(B, Smax, D, hidden):
    tok = _nbytes((B, Smax, D), jnp.bfloat16)
    weights = (_nbytes((D, 3 * D), jnp.bfloat16) + _nbytes((D, D), jnp.bfloat16)
               + _nbytes((D, hidden), jnp.bfloat16) + _nbytes((hidden, D), jnp.bfloat16))
    small = 10 * _nbytes((1, max(hidden, 3 * D)), jnp.float32)
    outb = _nbytes((B, D), jnp.float32)
    rows = B * Smax
    interm = 4 * (2 * rows * 3 * D + 3 * B * Smax * Smax
                  + rows * hidden + 8 * rows * D)
    return int(2 * (2 * tok + weights + small + outb) + interm + (8 << 20))


def fusion_all_pairs(p, tokens, q_mod, k_mod, q_len, k_len):
    """tokens: (3, B, Smax, D) bf16.  Returns pooled (6, B, D) f32."""
    _, B, Smax, D = tokens.shape
    hidden = p["w1"].shape[1]

    def full(s0, s1):
        return pl.BlockSpec((s0, s1), lambda i, qm, km, ql, kl: (0, 0))

    q_spec = pl.BlockSpec((None, B, Smax, D),
                          lambda i, qm, km, ql, kl: (qm[i], 0, 0, 0))
    k_spec = pl.BlockSpec((None, B, Smax, D),
                          lambda i, qm, km, ql, kl: (km[i], 0, 0, 0))

    grid_spec = pltpu.PrefetchScalarGridSpec(
        num_scalar_prefetch=4,
        grid=(6,),
        in_specs=[
            q_spec, k_spec,
            full(1, D), full(1, D), full(1, D), full(1, D),      # lnq, lnk
            full(D, 3 * D), full(1, 3 * D),                      # fused wqkv, bqkv
            full(D, D), full(1, D),                              # wo, bo
            full(1, D), full(1, D),                              # ln2
            full(D, hidden), full(1, hidden),                    # mlp w1, b1
            full(hidden, D), full(1, D),                         # mlp w2, b2
        ],
        out_specs=pl.BlockSpec((None, B, D),
                               lambda i, qm, km, ql, kl: (i, 0, 0)),
    )

    out = pl.pallas_call(
        _fusion6_kernel,
        out_shape=jax.ShapeDtypeStruct((6, B, D), jnp.float32),
        grid_spec=grid_spec,
        compiler_params=pltpu.CompilerParams(
            dimension_semantics=("parallel",),
            vmem_limit_bytes=_fusion_vmem_limit(B, Smax, D, hidden)),
    )(q_mod, k_mod, q_len, k_len, tokens, tokens,
      p["lnq_g"], p["lnq_b"], p["lnk_g"], p["lnk_b"],
      p["wqkv"], p["bqkv"], p["wo"], p["bo"],
      p["ln2_g"], p["ln2_b"], p["w1"], p["b1"], p["w2"], p["b2"])
    return out


# -----------------------------------------------------------------------------
# Classifier heads: (B, 2D) @ (2D, num_classes) — negligible work, done in XLA
# (keeps Pallas outputs lane-dense and drops 3 tiny kernel launches).
# -----------------------------------------------------------------------------
def classifier_head(p, x):
    # TODO(synk): Classifier internals not in the given source; linear head.
    return jnp.dot(x, p["w"], preferred_element_type=jnp.float32) + p["b"]


# -----------------------------------------------------------------------------
# Parameter construction (deterministic, synthetic).  Matmul weights in bf16,
# biases / LayerNorm affine params in f32.
# -----------------------------------------------------------------------------
def init_params(key, D=128, Dv=256, Dt=128, Da=256, hidden=512, num_classes=10):
    keys = iter(jax.random.split(key, 64))

    def dense_f32(din, dout, scale=0.02):
        return jax.random.normal(next(keys), (din, dout), jnp.float32) * scale

    def dense(din, dout, dtype=jnp.bfloat16, scale=0.02):
        return dense_f32(din, dout, scale).astype(dtype)

    def proj(din):
        return dict(w1=dense(din, D), b1=jnp.zeros((1, D), jnp.float32),
                    w2=dense(D, D), b2=jnp.zeros((1, D), jnp.float32),
                    gamma=jnp.ones((1, D), jnp.float32),
                    beta=jnp.zeros((1, D), jnp.float32))

    # fused QKV weight: 1/sqrt(D) attention scale pre-folded into the Q slice
    wq = dense_f32(D, D) * (D ** -0.5)
    wk = dense_f32(D, D)
    wv = dense_f32(D, D)
    wqkv = jnp.concatenate([wq, wk, wv], axis=1).astype(jnp.bfloat16)    # (D, 3D)
    bqkv = jnp.zeros((1, 3 * D), jnp.float32)

    fusion = dict(
        lnq_g=jnp.ones((1, D), jnp.float32), lnq_b=jnp.zeros((1, D), jnp.float32),
        lnk_g=jnp.ones((1, D), jnp.float32), lnk_b=jnp.zeros((1, D), jnp.float32),
        wqkv=wqkv, bqkv=bqkv,
        wo=dense(D, D), bo=jnp.zeros((1, D), jnp.float32),
        ln2_g=jnp.ones((1, D), jnp.float32), ln2_b=jnp.zeros((1, D), jnp.float32),
        w1=dense(D, hidden), b1=jnp.zeros((1, hidden), jnp.float32),
        w2=dense(hidden, D), b2=jnp.zeros((1, D), jnp.float32),
    )

    def cls_head():
        return dict(w=dense(2 * D, num_classes, dtype=jnp.float32),
                    b=jnp.zeros((1, num_classes), jnp.float32))

    return dict(
        video_proj=proj(Dv), text_proj=proj(Dt), audio_proj=proj(Da),
        fusion=fusion,  # single FusionTransformer instance shared by all 6 calls
        cls1=cls_head(), cls2=cls_head(), cls3=cls_head(),
        D=D,
    )


# -----------------------------------------------------------------------------
# Forward pass (mirrors EverythingAtOnceModel.forward, non-'projection_net' path)
# -----------------------------------------------------------------------------
def forward(params, video, audio, nframes, text, category):
    D = params["D"]
    B, Sv, Dv = video.shape
    St = text.shape[1]

    # extract_text_tokens / extract_video_tokens: gated proj + LayerNorm
    text_tokens = gated_proj_ln(text.reshape(-1, text.shape[-1]),
                                params["text_proj"]).reshape(B, St, D)
    video_tokens = gated_proj_ln(video.reshape(-1, Dv),
                                 params["video_proj"]).reshape(B, Sv, D)

    # extract_audio_tokens: davenet(audio).permute(0,2,1) -> proj -> LayerNorm
    # (audio here is the DAVEnet-output feature map, see TODOs at top of file)
    audio_feats = jnp.transpose(audio, (0, 2, 1))                       # (B, T, Ca)
    Sa = audio_feats.shape[1]
    audio_tokens = gated_proj_ln(audio_feats.reshape(-1, audio_feats.shape[-1]),
                                 params["audio_proj"]).reshape(B, Sa, D)

    # Single (3, B, Smax, D) modality tensor — no per-pair duplication; the
    # fusion kernel picks query/key modality blocks via scalar-prefetch indices.
    Smax = max(Sv, St, Sa)

    def pad_seq(t):
        s = t.shape[1]
        return t if s == Smax else jnp.pad(t, ((0, 0), (0, Smax - s), (0, 0)))

    tokens = jnp.stack([pad_seq(video_tokens),     # modality 0 = video
                        pad_seq(audio_tokens),     # modality 1 = audio
                        pad_seq(text_tokens)],     # modality 2 = text
                       axis=0)

    # Pair order (query, key): va, av, at, ta, tv, vt
    q_mod = jnp.array([1, 0, 2, 1, 0, 2], jnp.int32)     # a, v, t, a, v, t
    k_mod = jnp.array([0, 1, 1, 2, 2, 0], jnp.int32)     # v, a, a, t, t, v
    q_len = jnp.array([Sa, Sv, St, Sa, Sv, St], jnp.int32)
    k_len = jnp.array([Sv, Sa, Sa, St, St, Sv], jnp.int32)

    pooled = fusion_all_pairs(params["fusion"], tokens, q_mod, k_mod, q_len, k_len)
    va, av, at, ta, tv, vt = (pooled[i] for i in range(6))               # (B, D) each

    vav = classifier_head(params["cls1"], jnp.concatenate([va, av], axis=1))
    ata = classifier_head(params["cls2"], jnp.concatenate([at, ta], axis=1))
    tvt = classifier_head(params["cls3"], jnp.concatenate([tv, vt], axis=1))
    return vav, ata, tvt


if __name__ == "__main__":
    key = jax.random.PRNGKey(0)
    kp, kv, ka, kt = jax.random.split(key, 4)

    B, Sv, St, Sa = 2, 8, 8, 8
    D, Dv, Dt, Da = 128, 256, 128, 256
    num_classes = 10

    params = init_params(kp, D=D, Dv=Dv, Dt=Dt, Da=Da, num_classes=num_classes)

    video = jax.random.normal(kv, (B, Sv, Dv), jnp.float32)
    text = jax.random.normal(kt, (B, St, Dt), jnp.float32)
    audio = jax.random.normal(ka, (B, Da, Sa), jnp.float32)  # DAVEnet-output layout (B, C, T)
    nframes = jnp.full((B,), Sa * 64, jnp.int32)
    category = jnp.zeros((B,), jnp.int32)

    vav, ata, tvt = forward(params, video, audio, nframes, text, category)
    jax.block_until_ready((vav, ata, tvt))

    assert vav.shape == (B, num_classes)
    assert ata.shape == (B, num_classes)
    assert tvt.shape == (B, num_classes)
    assert all(bool(jnp.all(jnp.isfinite(x))) for x in (vav, ata, tvt))
    print("KERNEL_OK")
</pallas_src>

<mosaic_0001>
module attributes {stable_mosaic.version = 11 : i64} {
  func.func @_gated_proj_ln_kernel(%arg0: i32, %arg1: memref<16x128xbf16, #tpu.memory_space<vmem>>, %arg2: memref<128x128xbf16, #tpu.memory_space<vmem>>, %arg3: memref<1x128xf32, #tpu.memory_space<vmem>>, %arg4: memref<128x128xbf16, #tpu.memory_space<vmem>>, %arg5: memref<1x128xf32, #tpu.memory_space<vmem>>, %arg6: memref<1x128xf32, #tpu.memory_space<vmem>>, %arg7: memref<1x128xf32, #tpu.memory_space<vmem>>, %arg8: memref<16x128xbf16, #tpu.memory_space<vmem>>) attributes {dimension_semantics = [#tpu.dimension_semantics<parallel>], iteration_bounds = array<i64: 1>, scalar_prefetch = 0 : i64, scratch_operands = 0 : i64, tpu.core_type = #tpu.core_type<tc>, window_params = [{transform_indices = @transform_0, window_bounds = array<i64: 16, 128>}, {pipeline_mode = #tpu.pipeline_mode<synchronous>, transform_indices = @transform_1, window_bounds = array<i64: 128, 128>}, {pipeline_mode = #tpu.pipeline_mode<synchronous>, transform_indices = @transform_2, window_bounds = array<i64: 1, 128>}, {pipeline_mode = #tpu.pipeline_mode<synchronous>, transform_indices = @transform_3, window_bounds = array<i64: 128, 128>}, {pipeline_mode = #tpu.pipeline_mode<synchronous>, transform_indices = @transform_4, window_bounds = array<i64: 1, 128>}, {pipeline_mode = #tpu.pipeline_mode<synchronous>, transform_indices = @transform_5, window_bounds = array<i64: 1, 128>}, {pipeline_mode = #tpu.pipeline_mode<synchronous>, transform_indices = @transform_6, window_bounds = array<i64: 1, 128>}, {transform_indices = @transform_7, window_bounds = array<i64: 16, 128>}]} {
    %c0 = arith.constant 0 : index
    %c0_0 = arith.constant 0 : index
    %0 = vector.load %arg1[%c0, %c0_0] : memref<16x128xbf16, #tpu.memory_space<vmem>>, vector<16x128xbf16>
    %c0_1 = arith.constant 0 : index
    %c0_2 = arith.constant 0 : index
    %1 = vector.load %arg2[%c0_1, %c0_2] : memref<128x128xbf16, #tpu.memory_space<vmem>>, vector<128x128xbf16>
    %cst = arith.constant dense<0.000000e+00> : vector<16x128xf32>
    %2 = tpu.matmul %0, %1, %cst {dimension_numbers = #tpu.dot_dimension_numbers<[1], [0], [0], [1], [0, 0, 1, 1], [], []>} : vector<16x128xbf16>, vector<128x128xbf16>, vector<16x128xf32> -> vector<16x128xf32>
    %c0_3 = arith.constant 0 : index
    %c0_4 = arith.constant 0 : index
    %3 = vector.load %arg3[%c0_3, %c0_4] : memref<1x128xf32, #tpu.memory_space<vmem>>, vector<1x128xf32>
    %4 = vector.broadcast %3 : vector<1x128xf32> to vector<16x128xf32>
    %5 = arith.addf %2, %4 : vector<16x128xf32>
    %6 = arith.truncf %5 : vector<16x128xf32> to vector<16x128xbf16>
    %c0_5 = arith.constant 0 : index
    %c0_6 = arith.constant 0 : index
    %7 = vector.load %arg4[%c0_5, %c0_6] : memref<128x128xbf16, #tpu.memory_space<vmem>>, vector<128x128xbf16>
    %cst_7 = arith.constant dense<0.000000e+00> : vector<16x128xf32>
    %8 = tpu.matmul %6, %7, %cst_7 {dimension_numbers = #tpu.dot_dimension_numbers<[1], [0], [0], [1], [0, 0, 1, 1], [], []>} : vector<16x128xbf16>, vector<128x128xbf16>, vector<16x128xf32> -> vector<16x128xf32>
    %c0_8 = arith.constant 0 : index
    %c0_9 = arith.constant 0 : index
    %9 = vector.load %arg5[%c0_8, %c0_9] : memref<1x128xf32, #tpu.memory_space<vmem>>, vector<1x128xf32>
    %10 = vector.broadcast %9 : vector<1x128xf32> to vector<16x128xf32>
    %11 = arith.addf %8, %10 : vector<16x128xf32>
    %12 = arith.negf %11 : vector<16x128xf32>
    %13 = math.exp %12 : vector<16x128xf32>
    %cst_10 = arith.constant 1.000000e+00 : f32
    %14 = vector.broadcast %cst_10 : f32 to vector<16x128xf32>
    %15 = arith.addf %14, %13 : vector<16x128xf32>
    %16 = arith.divf %14, %15 : vector<16x128xf32>
    %17 = arith.mulf %5, %16 : vector<16x128xf32>
    %cst_11 = arith.constant dense<0.000000e+00> : vector<16xf32>
    %18 = vector.multi_reduction <add>, %17, %cst_11 [1] : vector<16x128xf32> to vector<16xf32>
    %19 = vector.shape_cast %18 : vector<16xf32> to vector<16x1xf32>
    %cst_12 = arith.constant 1.280000e+02 : f32
    %20 = vector.broadcast %cst_12 : f32 to vector<16x1xf32>
    %21 = arith.divf %19, %20 : vector<16x1xf32>
    %22 = vector.broadcast %21 : vector<16x1xf32> to vector<16x128xf32>
    %23 = arith.subf %17, %22 : vector<16x128xf32>
    %24 = arith.mulf %23, %23 : vector<16x128xf32>
    %cst_13 = arith.constant dense<0.000000e+00> : vector<16xf32>
    %25 = vector.multi_reduction <add>, %24, %cst_13 [1] : vector<16x128xf32> to vector<16xf32>
    %26 = vector.shape_cast %25 : vector<16xf32> to vector<16x1xf32>
    %cst_14 = arith.constant 1.280000e+02 : f32
    %27 = vector.broadcast %cst_14 : f32 to vector<16x1xf32>
    %28 = arith.divf %26, %27 : vector<16x1xf32>
    %29 = vector.broadcast %21 : vector<16x1xf32> to vector<16x128xf32>
    %30 = arith.subf %17, %29 : vector<16x128xf32>
    %cst_15 = arith.constant 9.99999997E-7 : f32
    %31 = vector.broadcast %cst_15 : f32 to vector<16x1xf32>
    %32 = arith.addf %28, %31 : vector<16x1xf32>
    %33 = math.rsqrt %32 : vector<16x1xf32>
    %34 = vector.broadcast %33 : vector<16x1xf32> to vector<16x128xf32>
    %35 = arith.mulf %30, %34 : vector<16x128xf32>
    %c0_16 = arith.constant 0 : index
    %c0_17 = arith.constant 0 : index
    %36 = vector.load %arg6[%c0_16, %c0_17] : memref<1x128xf32, #tpu.memory_space<vmem>>, vector<1x128xf32>
    %37 = vector.broadcast %36 : vector<1x128xf32> to vector<16x128xf32>
    %38 = arith.mulf %35, %37 : vector<16x128xf32>
    %c0_18 = arith.constant 0 : index
    %c0_19 = arith.constant 0 : index
    %39 = vector.load %arg7[%c0_18, %c0_19] : memref<1x128xf32, #tpu.memory_space<vmem>>, vector<1x128xf32>
    %40 = vector.broadcast %39 : vector<1x128xf32> to vector<16x128xf32>
    %41 = arith.addf %38, %40 : vector<16x128xf32>
    %42 = arith.truncf %41 : vector<16x128xf32> to vector<16x128xbf16>
    %c0_20 = arith.constant 0 : index
    %c0_21 = arith.constant 0 : index
    %43 = vector.load %arg8[%c0_20, %c0_21] : memref<16x128xbf16, #tpu.memory_space<vmem>>, vector<16x128xbf16>
    tpu.vector_store %arg8[%c0_20, %c0_21], %42 {strides = array<i32>} : memref<16x128xbf16, #tpu.memory_space<vmem>>, vector<16x128xbf16>,
    return
  }
  func.func @transform_0(%arg0: i32) -> (i32, i32) {
    %c0_i32 = arith.constant 0 : i32
    %c0_i32_0 = arith.constant 0 : i32
    return %arg0, %c0_i32 : i32, i32
  }
  func.func @transform_1(%arg0: i32) -> (i32, i32) {
    %c0_i32 = arith.constant 0 : i32
    %c0_i32_0 = arith.constant 0 : i32
    %c0_i32_1 = arith.constant 0 : i32
    return %c0_i32, %c0_i32_0 : i32, i32
  }
  func.func @transform_2(%arg0: i32) -> (i32, i32) {
    %c0_i32 = arith.constant 0 : i32
    %c0_i32_0 = arith.constant 0 : i32
    %c0_i32_1 = arith.constant 0 : i32
    return %c0_i32, %c0_i32_0 : i32, i32
  }
  func.func @transform_3(%arg0: i32) -> (i32, i32) {
    %c0_i32 = arith.constant 0 : i32
    %c0_i32_0 = arith.constant 0 : i32
    %c0_i32_1 = arith.constant 0 : i32
    return %c0_i32, %c0_i32_0 : i32, i32
  }
  func.func @transform_4(%arg0: i32) -> (i32, i32) {
    %c0_i32 = arith.constant 0 : i32
    %c0_i32_0 = arith.constant 0 : i32
    %c0_i32_1 = arith.constant 0 : i32
    return %c0_i32, %c0_i32_0 : i32, i32
  }
  func.func @transform_5(%arg0: i32) -> (i32, i32) {
    %c0_i32 = arith.constant 0 : i32
    %c0_i32_0 = arith.constant 0 : i32
    %c0_i32_1 = arith.constant 0 : i32
    return %c0_i32, %c0_i32_0 : i32, i32
  }
  func.func @transform_6(%arg0: i32) -> (i32, i32) {
    %c0_i32 = arith.constant 0 : i32
    %c0_i32_0 = arith.constant 0 : i32
    %c0_i32_1 = arith.constant 0 : i32
    return %c0_i32, %c0_i32_0 : i32, i32
  }
  func.func @transform_7(%arg0: i32) -> (i32, i32) {
    %c0_i32 = arith.constant 0 : i32
    %c0_i32_0 = arith.constant 0 : i32
    return %arg0, %c0_i32 : i32, i32
  }
}

</mosaic_0001>

<llo_original>
// kernel: tpu_custom_call.1
$region0: #{tpu_custom_call.1}
  #allocation0 [shape = 'u32[]', space=smem, size = 0x4, offset = 0x4, fixed_abs, tag = 'smem constant byte address 0x4 - core index']
  #allocation1 [shape = 'u32[144,128]{1,0:T(1,128)}', space=vmem, size = 0x12000, scoped, tag = 'internal scratch']
  %s0 = inlined_call_operand.hbm [shape: bf16[16,128], index: 0, kind: input, shape index: {}]
  %s1 = inlined_call_operand.hbm [shape: bf16[128,128], index: 1, kind: input, shape index: {}]
  %s2 = inlined_call_operand.vmem [shape: f32[1,128], index: 2, kind: input, shape index: {}]
  %s3 = inlined_call_operand.hbm [shape: bf16[128,128], index: 3, kind: input, shape index: {}]
  %s4 = inlined_call_operand.vmem [shape: f32[1,128], index: 4, kind: input, shape index: {}]
  %s5 = inlined_call_operand.vmem [shape: f32[1,128], index: 5, kind: input, shape index: {}]
  %s6 = inlined_call_operand.vmem [shape: f32[1,128], index: 6, kind: input, shape index: {}]
  %s7 = inlined_call_operand.hbm [shape: bf16[16,128], index: 7, kind: output, shape index: {}]
  %s8 = sld [smem:[#allocation0]]
  $region50: #{tpu_custom_call.1} parent=0
    _
  %s10 = ssub.s32 1, %s8
  %s11 = scalar_select 0, %s10, %s8
  $region1: #{tpu_custom_call.1} parent=0
    #allocation2 [shape = 'u8[4096]{0}', space=vmem, size = 0x1000, scoped, tag = 'input window, operand 0, single buffered']
    #allocation3 [shape = 's32[1]{0}', space=sflag, size = 0x4, scoped, tag = 'scoped memory for tpu_custom_call.1']
    #allocation4 [shape = 's32[1]{0}', space=sflag, size = 0x4, scoped, tag = 'scoped memory for tpu_custom_call.1']
    #allocation5 [shape = 'u8[32768]{0}', space=vmem, size = 0x8000, scoped, tag = 'input window, operand 1, single buffered']
    #allocation6 [shape = 's32[1]{0}', space=sflag, size = 0x4, scoped, tag = 'scoped memory for tpu_custom_call.1']
    #allocation7 [shape = 'u8[32768]{0}', space=vmem, size = 0x8000, scoped, tag = 'input window, operand 3, single buffered']
    #allocation8 [shape = 'u8[4096]{0}', space=vmem, size = 0x1000, scoped, tag = 'output window, operand 0, single buffered']
    %12 = vsyncpa [#allocation3], 0
    %13 = vsyncpa [#allocation6], 0
    %14 = vsyncpa [#allocation4], 0
    // Predicated region
    $region2: #{tpu_custom_call.1} parent=1 // pred_check
      _
    $region3: #{tpu_custom_call.1} parent=1 // pred_check_branch
      %16 = sbr.rel (0) target = $region5
    $region4: #{tpu_custom_call.1} parent=1 // pred_region
      %s18 = ssub.s32 128, 128
      %19 = vsyncadd [#allocation3], %s18
      %s20 = sshll.u32 [#allocation2], 4
      %s21 = int_to_ptr.vmem [resolvable:$true] %s20
      %26 = dma.hbm_to_vmem [thread:$0]  %s0, 128, %s21, [#allocation3], 64, 64, 4
    $region5: #{tpu_custom_call.1} parent=1 // pred_fallthru
      _
    // Predicated region
    $region6: #{tpu_custom_call.1} parent=1 // pred_check
      _
    $region7: #{tpu_custom_call.1} parent=1 // pred_check_branch
      %28 = sbr.rel (0) target = $region9
    $region8: #{tpu_custom_call.1} parent=1 // pred_region
      %s30 = ssub.s32 1024, 1024
      %31 = vsyncadd [#allocation6], %s30
      %s32 = sshll.u32 [#allocation5], 4
      %s33 = int_to_ptr.vmem [resolvable:$true] %s32
      %38 = dma.hbm_to_vmem [thread:$0]  %s1, 1024, %s33, [#allocation6], 64, 64, 4
    $region9: #{tpu_custom_call.1} parent=1 // pred_fallthru
      _
    // Predicated region
    $region10: #{tpu_custom_call.1} parent=1 // pred_check
      _
    $region11: #{tpu_custom_call.1} parent=1 // pred_check_branch
      %40 = sbr.rel (0) target = $region13
    $region12: #{tpu_custom_call.1} parent=1 // pred_region
      _
    $region13: #{tpu_custom_call.1} parent=1 // pred_fallthru
      _
    // Predicated region
    $region14: #{tpu_custom_call.1} parent=1 // pred_check
      _
    $region15: #{tpu_custom_call.1} parent=1 // pred_check_branch
      %42 = sbr.rel (0) target = $region17
    $region16: #{tpu_custom_call.1} parent=1 // pred_region
      %s44 = ssub.s32 1024, 1024
      %45 = vsyncadd [#allocation6], %s44
      %s46 = sshll.u32 [#allocation7], 4
      %s47 = int_to_ptr.vmem [resolvable:$true] %s46
      %52 = dma.hbm_to_vmem [thread:$0]  %s3, 1024, %s47, [#allocation6], 64, 64, 4
    $region17: #{tpu_custom_call.1} parent=1 // pred_fallthru
      _
    // Predicated region
    $region18: #{tpu_custom_call.1} parent=1 // pred_check
      _
    $region19: #{tpu_custom_call.1} parent=1 // pred_check_branch
      %54 = sbr.rel (0) target = $region21
    $region20: #{tpu_custom_call.1} parent=1 // pred_region
      _
    $region21: #{tpu_custom_call.1} parent=1 // pred_fallthru
      _
    // Predicated region
    $region22: #{tpu_custom_call.1} parent=1 // pred_check
      _
    $region23: #{tpu_custom_call.1} parent=1 // pred_check_branch
      %56 = sbr.rel (0) target = $region25
    $region24: #{tpu_custom_call.1} parent=1 // pred_region
      _
    $region25: #{tpu_custom_call.1} parent=1 // pred_fallthru
      _
    // Predicated region
    $region26: #{tpu_custom_call.1} parent=1 // pred_check
      _
    $region27: #{tpu_custom_call.1} parent=1 // pred_check_branch
      %58 = sbr.rel (0) target = $region29
    $region28: #{tpu_custom_call.1} parent=1 // pred_region
      _
    $region29: #{tpu_custom_call.1} parent=1 // pred_fallthru
      _
    // Predicated region
    $region30: #{tpu_custom_call.1} parent=1 // pred_check
      _
    $region31: #{tpu_custom_call.1} parent=1 // pred_check_branch
      %60 = sbr.rel (0) target = $region33
    $region32: #{tpu_custom_call.1} parent=1 // pred_region
      %61 = dma.done [#allocation3], 128
    $region33: #{tpu_custom_call.1} parent=1 // pred_fallthru
      _
    // Predicated region
    $region34: #{tpu_custom_call.1} parent=1 // pred_check
      _
    $region35: #{tpu_custom_call.1} parent=1 // pred_check_branch
      %63 = sbr.rel (0) target = $region37
    $region36: #{tpu_custom_call.1} parent=1 // pred_region
      %64 = dma.done [#allocation6], 1024
    $region37: #{tpu_custom_call.1} parent=1 // pred_fallthru
      _
    // Predicated region
    $region38: #{tpu_custom_call.1} parent=1 // pred_check
      _
    $region39: #{tpu_custom_call.1} parent=1 // pred_check_branch
      %66 = sbr.rel (0) target = $region41
    $region40: #{tpu_custom_call.1} parent=1 // pred_region
      %67 = dma.done [#allocation6], 1024
    $region41: #{tpu_custom_call.1} parent=1 // pred_fallthru
      _
    %v69 = vld [vmem:[#allocation2] sm:$0xf]
    %v70 = vld [vmem:[#allocation2 + $0x4] sm:$0xf]
    %v71 = vld [vmem:[#allocation5] sm:$0xf]
    %v72 = vld [vmem:[#allocation5 + $0x4] sm:$0xf]
    %v73 = vld [vmem:[#allocation5 + $0x8] sm:$0xf]
    %v74 = vld [vmem:[#allocation5 + $0xc] sm:$0xf]
    %v75 = vld [vmem:[#allocation5 + $0x10] sm:$0xf]
    %v76 = vld [vmem:[#allocation5 + $0x14] sm:$0xf]
    %v77 = vld [vmem:[#allocation5 + $0x18] sm:$0xf]
    %v78 = vld [vmem:[#allocation5 + $0x1c] sm:$0xf]
    %v79 = vld [vmem:[#allocation5 + $0x20] sm:$0xf]
    %v80 = vld [vmem:[#allocation5 + $0x24] sm:$0xf]
    %v81 = vld [vmem:[#allocation5 + $0x28] sm:$0xf]
    %v82 = vld [vmem:[#allocation5 + $0x2c] sm:$0xf]
    %v83 = vld [vmem:[#allocation5 + $0x30] sm:$0xf]
    %v84 = vld [vmem:[#allocation5 + $0x34] sm:$0xf]
    %v85 = vld [vmem:[#allocation5 + $0x38] sm:$0xf]
    %v86 = vld [vmem:[#allocation5 + $0x3c] sm:$0xf]
    %v87 = vld [vmem:[%s2] sm:$0x1]
    %v89 = vlaneseq
    %v90 = vshrl.u32 %v89, 7
    %v91 = vsub.s32 0, %v90
    %v92 = vrot.slane %v87, %v91
    %v96 = vunpack.c.l.b16 %v69
    %v97 = vunpack.c.l.b16 %v70
    %v98 = vpack.c.b16 %v97, %v96
    %v116 = vunpack.c.l.b16 %v71
    %v117 = vunpack.c.l.b16 %v72
    %v118 = vunpack.c.l.b16 %v73
    %v119 = vunpack.c.l.b16 %v74
    %v120 = vunpack.c.l.b16 %v75
    %v121 = vunpack.c.l.b16 %v76
    %v122 = vunpack.c.l.b16 %v77
    %v123 = vunpack.c.l.b16 %v78
    %v124 = vunpack.c.l.b16 %v79
    %v125 = vunpack.c.l.b16 %v80
    %v126 = vunpack.c.l.b16 %v81
    %v127 = vunpack.c.l.b16 %v82
    %v128 = vunpack.c.l.b16 %v83
    %v129 = vunpack.c.l.b16 %v84
    %v130 = vunpack.c.l.b16 %v85
    %v131 = vunpack.c.l.b16 %v86
    %v132 = vpack.c.b16 %v117, %v116
    %v133 = vpack.c.b16 %v119, %v118
    %v134 = vpack.c.b16 %v121, %v120
    %v135 = vpack.c.b16 %v123, %v122
    %v136 = vpack.c.b16 %v125, %v124
    %v137 = vpack.c.b16 %v127, %v126
    %v138 = vpack.c.b16 %v129, %v128
    %v139 = vpack.c.b16 %v131, %v130
    %148 = vmatprep.subr.bf16.mxu0 0
    %149 = vmatpush1.bf16.msra.mxu0 %v132
    %150 = vmatprep.subr.bf16.mxu0 0
    %151 = vmatpush1.bf16.msra.mxu0 %v133
    %152 = vmatprep.subr.bf16.mxu0 0
    %153 = vmatpush1.bf16.msra.mxu0 %v134
    %154 = vmatprep.subr.bf16.mxu0 0
    %155 = vmatpush1.bf16.msra.mxu0 %v135
    %156 = vmatprep.subr.bf16.mxu0 0
    %157 = vmatpush1.bf16.msra.mxu0 %v136
    %158 = vmatprep.subr.bf16.mxu0 0
    %159 = vmatpush1.bf16.msra.mxu0 %v137
    %160 = vmatprep.subr.bf16.mxu0 0
    %161 = vmatpush1.bf16.msra.mxu0 %v138
    %162 = vmatprep.subr.bf16.mxu0 0
    %163 = vmatpush1.bf16.msra.mxu0 %v139
    %164 = vmatprep.subr.bf16.mxu0 0
    %165 = vmatpush1.bf16.msra.mxu0 0
    %166 = vmatprep.subr.bf16.mxu0 0
    %167 = vmatpush1.bf16.msra.mxu0 0
    %168 = vmatprep.subr.bf16.mxu0 0
    %169 = vmatpush1.bf16.msra.mxu0 0
    %170 = vmatprep.subr.bf16.mxu0 0
    %171 = vmatpush1.bf16.msra.mxu0 0
    %172 = vmatprep.subr.bf16.mxu0 0
    %173 = vmatpush1.bf16.msra.mxu0 0
    %174 = vmatprep.subr.bf16.mxu0 0
    %175 = vmatpush1.bf16.msra.mxu0 0
    %176 = vmatprep.subr.bf16.mxu0 0
    %177 = vmatpush1.bf16.msra.mxu0 0
    %178 = vmatprep.subr.bf16.mxu0 0
    %179 = vmatpush1.bf16.msra.mxu0 0
    %180 = vmatprep.mubr.bf16.mxu0 0
    %181 = vmatmul.mubr.bf16.gmra.mrb[0].mxu0 %v98
    %v182 = vpop.f32.mrb[0].mxu0
    %v183 = vadd.f32 %v92, %v182
    %v184 = vpop.f32.mrb[0].mxu0
    %v185 = vpop.f32.mrb[0].mxu0
    %v186 = vadd.f32 %v92, %v185
    %v187 = vpop.f32.mrb[0].mxu0
    %188 = vdwg.mxu0
    %v189 = vpack.c.bf16 %v186, %v183
    %v190 = vld [vmem:[#allocation7] sm:$0xf]
    %v191 = vld [vmem:[#allocation7 + $0x4] sm:$0xf]
    %v192 = vld [vmem:[#allocation7 + $0x8] sm:$0xf]
    %v193 = vld [vmem:[#allocation7 + $0xc] sm:$0xf]
    %v194 = vld [vmem:[#allocation7 + $0x10] sm:$0xf]
    %v195 = vld [vmem:[#allocation7 + $0x14] sm:$0xf]
    %v196 = vld [vmem:[#allocation7 + $0x18] sm:$0xf]
    %v197 = vld [vmem:[#allocation7 + $0x1c] sm:$0xf]
    %v198 = vld [vmem:[#allocation7 + $0x20] sm:$0xf]
    %v199 = vld [vmem:[#allocation7 + $0x24] sm:$0xf]
    %v200 = vld [vmem:[#allocation7 + $0x28] sm:$0xf]
    %v201 = vld [vmem:[#allocation7 + $0x2c] sm:$0xf]
    %v202 = vld [vmem:[#allocation7 + $0x30] sm:$0xf]
    %v203 = vld [vmem:[#allocation7 + $0x34] sm:$0xf]
    %v204 = vld [vmem:[#allocation7 + $0x38] sm:$0xf]
    %v205 = vld [vmem:[#allocation7 + $0x3c] sm:$0xf]
    %v206 = vld [vmem:[%s4] sm:$0x1]
    %v208 = vlaneseq
    %v209 = vshrl.u32 %v208, 7
    %v210 = vsub.s32 0, %v209
    %v211 = vrot.slane %v206, %v210
    %v229 = vunpack.c.l.b16 %v190
    %v230 = vunpack.c.l.b16 %v191
    %v231 = vunpack.c.l.b16 %v192
    %v232 = vunpack.c.l.b16 %v193
    %v233 = vunpack.c.l.b16 %v194
    %v234 = vunpack.c.l.b16 %v195
    %v235 = vunpack.c.l.b16 %v196
    %v236 = vunpack.c.l.b16 %v197
    %v237 = vunpack.c.l.b16 %v198
    %v238 = vunpack.c.l.b16 %v199
    %v239 = vunpack.c.l.b16 %v200
    %v240 = vunpack.c.l.b16 %v201
    %v241 = vunpack.c.l.b16 %v202
    %v242 = vunpack.c.l.b16 %v203
    %v243 = vunpack.c.l.b16 %v204
    %v244 = vunpack.c.l.b16 %v205
    %v245 = vpack.c.b16 %v230, %v229
    %v246 = vpack.c.b16 %v232, %v231
    %v247 = vpack.c.b16 %v234, %v233
    %v248 = vpack.c.b16 %v236, %v235
    %v249 = vpack.c.b16 %v238, %v237
    %v250 = vpack.c.b16 %v240, %v239
    %v251 = vpack.c.b16 %v242, %v241
    %v252 = vpack.c.b16 %v244, %v243
    %261 = vmatprep.subr.bf16.mxu0 0
    %262 = vmatpush1.bf16.msra.mxu0 %v245
    %263 = vmatprep.subr.bf16.mxu0 0
    %264 = vmatpush1.bf16.msra.mxu0 %v246
    %265 = vmatprep.subr.bf16.mxu0 0
    %266 = vmatpush1.bf16.msra.mxu0 %v247
    %267 = vmatprep.subr.bf16.mxu0 0
    %268 = vmatpush1.bf16.msra.mxu0 %v248
    %269 = vmatprep.subr.bf16.mxu0 0
    %270 = vmatpush1.bf16.msra.mxu0 %v249
    %271 = vmatprep.subr.bf16.mxu0 0
    %272 = vmatpush1.bf16.msra.mxu0 %v250
    %273 = vmatprep.subr.bf16.mxu0 0
    %274 = vmatpush1.bf16.msra.mxu0 %v251
    %275 = vmatprep.subr.bf16.mxu0 0
    %276 = vmatpush1.bf16.msra.mxu0 %v252
    %277 = vmatprep.subr.bf16.mxu0 0
    %278 = vmatpush1.bf16.msra.mxu0 0
    %279 = vmatprep.subr.bf16.mxu0 0
    %280 = vmatpush1.bf16.msra.mxu0 0
    %281 = vmatprep.subr.bf16.mxu0 0
    %282 = vmatpush1.bf16.msra.mxu0 0
    %283 = vmatprep.subr.bf16.mxu0 0
    %284 = vmatpush1.bf16.msra.mxu0 0
    %285 = vmatprep.subr.bf16.mxu0 0
    %286 = vmatpush1.bf16.msra.mxu0 0
    %287 = vmatprep.subr.bf16.mxu0 0
    %288 = vmatpush1.bf16.msra.mxu0 0
    %289 = vmatprep.subr.bf16.mxu0 0
    %290 = vmatpush1.bf16.msra.mxu0 0
    %291 = vmatprep.subr.bf16.mxu0 0
    %292 = vmatpush1.bf16.msra.mxu0 0
    %293 = vmatprep.mubr.bf16.mxu0 0
    %294 = vmatmul.mubr.bf16.gmra.mrb[0].mxu0 %v189
    %v295 = vpop.f32.mrb[0].mxu0
    %v296 = vadd.f32 %v211, %v295
    %v297 = vpop.f32.mrb[0].mxu0
    %v298 = vpop.f32.mrb[0].mxu0
    %v299 = vadd.f32 %v211, %v298
    %v300 = vpop.f32.mrb[0].mxu0
    %301 = vdwg.mxu0
    %v302 = vxor.u32 %v296, 2147483648
    %v303 = vxor.u32 %v299, 2147483648
    %v304 = vmul.f32 %v302, 1.442695
    %v305 = vpow.pop %v304
    %v306 = vmul.f32 %v303, 1.442695
    %v307 = vpow.pop %v306
    %v308 = vadd.f32 %v305, 1.0
    %v309 = vadd.f32 %v307, 1.0
    %v310 = vrcp.pop %v308
    %v311 = vmul.f32 1.0, %v310
    %v312 = vrcp.pop %v309
    %v313 = vmul.f32 1.0, %v312
    %v314 = vmul.f32 %v183, %v311
    %v315 = vmul.f32 %v186, %v313
    %316 = vadd.xlane.f32.xlu0 %v314
    %v317 = vpop.xlane.xlu0 %316
    %318 = vadd.xlane.f32.xlu0 %v315
    %v319 = vpop.xlane.xlu0 %318
    %v320 = vrcp.pop 128.0
    %v321 = vmul.f32 %v317, %v320
    %v322 = vmul.f32 %v319, %v320
    %v323 = vsub.f32 %v314, %v321
    %v324 = vsub.f32 %v315, %v322
    %v325 = vmul.f32 %v323, %v323
    %v326 = vmul.f32 %v324, %v324
    %327 = vadd.xlane.f32.xlu0 %v325
    %v328 = vpop.xlane.xlu0 %327
    %329 = vadd.xlane.f32.xlu0 %v326
    %v330 = vpop.xlane.xlu0 %329
    %v331 = vmul.f32 %v328, %v320
    %v332 = vmul.f32 %v330, %v320
    %v333 = vadd.f32 %v331, 1e-06
    %v334 = vadd.f32 %v332, 1e-06
    %v335 = vrsqrt.pop %v333
    %v336 = vrsqrt.pop %v334
    %v337 = vmul.f32 %v323, %v335
    %v338 = vmul.f32 %v324, %v336
    %v339 = vld [vmem:[%s5] sm:$0x1]
    %v341 = vlaneseq
    %v342 = vshrl.u32 %v341, 7
    %v343 = vsub.s32 0, %v342
    %v344 = vrot.slane %v339, %v343
    %v346 = vmul.f32 %v337, %v344
    %v347 = vmul.f32 %v338, %v344
    %v348 = vld [vmem:[%s6] sm:$0x1]
    %v350 = vlaneseq
    %v351 = vshrl.u32 %v350, 7
    %v352 = vsub.s32 0, %v351
    %v353 = vrot.slane %v348, %v352
    %v355 = vadd.f32 %v346, %v353
    %v356 = vadd.f32 %v347, %v353
    %v357 = vpack.c.bf16 %v356, %v355
    %v359 = vunpack.c.l.b16 %v357
    %v360 = vunpack.c.h.b16 %v357
    %v361 = vpack.c.b16 %v359, %v359
    %v362 = vpack.c.b16 %v360, %v360
    %365 = vst [vmem:[#allocation8] sm:$0xf] %v361
    %366 = vst [vmem:[#allocation8 + $0x4] sm:$0xf] %v362
    // Predicated region
    $region42: #{tpu_custom_call.1} parent=1 // pred_check
      _
    $region43: #{tpu_custom_call.1} parent=1 // pred_check_branch
      %368 = sbr.rel (0) target = $region45
    $region44: #{tpu_custom_call.1} parent=1 // pred_region
      %s370 = ssub.s32 128, 128
      %371 = vsyncadd [#allocation4], %s370
      %s372 = sshll.u32 [#allocation8], 4
      %s373 = int_to_ptr.vmem [resolvable:$true] %s372
      %378 = dma.vmem_to_hbm [thread:$0]  %s373, 128, %s7, [#allocation4], 64, 64, 4
    $region45: #{tpu_custom_call.1} parent=1 // pred_fallthru
      _
    // Predicated region
    $region46: #{tpu_custom_call.1} parent=1 // pred_check
      _
    $region47: #{tpu_custom_call.1} parent=1 // pred_check_branch
      %380 = sbr.rel (0) target = $region49
    $region48: #{tpu_custom_call.1} parent=1 // pred_region
      %381 = dma.done [#allocation4], 128
    $region49: #{tpu_custom_call.1} parent=1 // pred_fallthru
      _
    %382 = vsyncpa [#allocation3], 1
    %383 = vsyncpa [#allocation6], 1
    %384 = vsyncpa [#allocation4], 1

</llo_original>
